<compile_context>
chip_gen: v7x
topology: tpu7x:2x2x1
jax: 0.10.0
libtpu: 0.0.40
codegen_flags: <defaults>
</compile_context>

<pallas_src>
import math
import functools

import jax
import jax.numpy as jnp
from jax.experimental import pallas as pl
from jax.experimental.pallas import tpu as pltpu


def _encoder_lstm_kernel(x_ref, h0_ref, c0_ref, wih_ref, whh_ref, b_ref,
                         out_ref, hn_ref, cn_ref,
                         *, seq_len, batch, hidden):
    """Whole-sequence LSTM forward in one kernel invocation.

    Refs (all whole-array VMEM blocks, f32):
      x_ref   : (T*B, D)    time-major flattened inputs (row t*B + b)
      h0_ref  : (B, H)      initial hidden state
      c0_ref  : (B, H)      initial cell state
      wih_ref : (D, 4H)     W_ih^T, gate columns permuted to (i, f, o, g)
      whh_ref : (H, 4H)     W_hh^T, same permutation
      b_ref   : (1, 4H)     b_ih + b_hh, same permutation
      out_ref : (B, T*H)    lane-dense output slab; columns [t*H:(t+1)*H] = h_t
      hn_ref  : (B, H)      final hidden state (written once)
      cn_ref  : (B, H)      final cell state   (written once)
    """
    H = hidden
    B = batch

    # Hoisted input projection: one MXU push with T*B rows.
    x_proj = (jnp.dot(x_ref[...], wih_ref[...],
                      preferred_element_type=jnp.float32)
              + b_ref[...])                              # (T*B, 4H)

    whh = whh_ref[...]                                   # (H, 4H)
    h = h0_ref[...]                                      # (B, H)
    c = c0_ref[...]                                      # (B, H)

    # Fully-unrolled serial recurrence; static slices only, h/c stay in vregs.
    for t in range(seq_len):
        gates = x_proj[t * B:(t + 1) * B, :] + jnp.dot(
            h, whh, preferred_element_type=jnp.float32)  # (B, 4H)

        # Permuted gate order (i, f, o, g): one wide sigmoid + one tanh.
        sig = jax.nn.sigmoid(gates[:, :3 * H])
        g_g = jnp.tanh(gates[:, 3 * H:])
        i_g = sig[:, :H]
        f_g = sig[:, H:2 * H]
        o_g = sig[:, 2 * H:]

        c = f_g * c + i_g * g_g
        h = o_g * jnp.tanh(c)

        out_ref[:, t * H:(t + 1) * H] = h

    # Final states written exactly once.
    hn_ref[...] = h
    cn_ref[...] = c


def encoder_forward(input_seq, params):
    """Pallas equivalent of Encoder.forward.

    Args:
      input_seq: (B, T, D) float32, batch_first like PyTorch.
      params: dict with w_ih (4H, D), w_hh (4H, H), b_ih (4H,), b_hh (4H,),
              h0 (1, 1, H), c0 (1, 1, H).

    Returns:
      (lstm_out, (h_n, c_n)) with shapes (B, T, H), (1, B, H), (1, B, H).
    """
    B, T, D = input_seq.shape
    H = params["w_hh"].shape[1]

    # (B, T, D) -> (T*B, D): row t*B + b holds (time t, batch b).
    x_flat = (jnp.transpose(input_seq, (1, 0, 2))
              .reshape(T * B, D).astype(jnp.float32))

    h0 = jnp.broadcast_to(params["h0"][0], (B, H)).astype(jnp.float32)
    c0 = jnp.broadcast_to(params["c0"][0], (B, H)).astype(jnp.float32)

    # Permute fused gate order (i, f, g, o) -> (i, f, o, g) so the three
    # sigmoid gates are contiguous; transpose weights once here.
    perm = jnp.concatenate([
        jnp.arange(0, H), jnp.arange(H, 2 * H),
        jnp.arange(3 * H, 4 * H), jnp.arange(2 * H, 3 * H)])
    wih_p = params["w_ih"][perm].T.astype(jnp.float32)           # (D, 4H)
    whh_p = params["w_hh"][perm].T.astype(jnp.float32)           # (H, 4H)
    b_p = ((params["b_ih"] + params["b_hh"])[perm]
           .reshape(1, 4 * H).astype(jnp.float32))               # (1, 4H)

    kernel = functools.partial(_encoder_lstm_kernel,
                               seq_len=T, batch=B, hidden=H)

    out_flat, h_n, c_n = pl.pallas_call(
        kernel,
        out_shape=(
            jax.ShapeDtypeStruct((B, T * H), jnp.float32),  # lane-dense lstm_out
            jax.ShapeDtypeStruct((B, H), jnp.float32),      # h_n
            jax.ShapeDtypeStruct((B, H), jnp.float32),      # c_n
        ),
        # Single invocation, whole arrays resident in VMEM (working set ~20 KiB).
        in_specs=[pl.BlockSpec(memory_space=pltpu.MemorySpace.VMEM)
                  for _ in range(6)],
        out_specs=(
            pl.BlockSpec(memory_space=pltpu.MemorySpace.VMEM),
            pl.BlockSpec(memory_space=pltpu.MemorySpace.VMEM),
            pl.BlockSpec(memory_space=pltpu.MemorySpace.VMEM),
        ),
    )(x_flat, h0, c0, wih_p, whh_p, b_p)

    lstm_out = out_flat.reshape(B, T, H)          # free: contiguous reshape
    hidden = (h_n[None, ...], c_n[None, ...])      # (num_layers=1, B, H)
    return lstm_out, hidden


def init_encoder_params(key, input_dim, hidden_size, num_layers=1):
    """Deterministic init matching nn.LSTM's uniform(-1/sqrt(H), 1/sqrt(H))."""
    assert num_layers == 1
    k = 1.0 / math.sqrt(hidden_size)
    k1, k2, k3, k4 = jax.random.split(key, 4)
    params = {
        "w_ih": jax.random.uniform(k1, (4 * hidden_size, input_dim),
                                   jnp.float32, -k, k),
        "w_hh": jax.random.uniform(k2, (4 * hidden_size, hidden_size),
                                   jnp.float32, -k, k),
        "b_ih": jax.random.uniform(k3, (4 * hidden_size,), jnp.float32, -k, k),
        "b_hh": jax.random.uniform(k4, (4 * hidden_size,), jnp.float32, -k, k),
        # nn.Parameter(torch.zeros(num_layers, 1, hidden_size))
        "h0": jnp.zeros((num_layers, 1, hidden_size), jnp.float32),
        "c0": jnp.zeros((num_layers, 1, hidden_size), jnp.float32),
    }
    return params


def _reference_lstm(input_seq, params):
    """Pure-JAX reference for correctness check (PyTorch gate order i,f,g,o)."""
    B, T, D = input_seq.shape
    H = params["w_hh"].shape[1]
    h = jnp.broadcast_to(params["h0"][0], (B, H))
    c = jnp.broadcast_to(params["c0"][0], (B, H))
    wih_t = params["w_ih"].T
    whh_t = params["w_hh"].T
    b = params["b_ih"] + params["b_hh"]

    def step(carry, x_t):
        h, c = carry
        gates = x_t @ wih_t + h @ whh_t + b
        i, f, g, o = jnp.split(gates, 4, axis=-1)
        i, f, o = jax.nn.sigmoid(i), jax.nn.sigmoid(f), jax.nn.sigmoid(o)
        g = jnp.tanh(g)
        c_new = f * c + i * g
        h_new = o * jnp.tanh(c_new)
        return (h_new, c_new), h_new

    (h_n, c_n), out_tm = jax.lax.scan(step, (h, c),
                                      jnp.transpose(input_seq, (1, 0, 2)))
    return jnp.transpose(out_tm, (1, 0, 2)), (h_n[None], c_n[None])


if __name__ == "__main__":
    # Small shapes consistent with Encoder(input_len=8, input_dim=4, hidden_size=32)
    B, T, D, H = 2, 8, 4, 32

    key = jax.random.PRNGKey(0)
    k_params, k_x = jax.random.split(key)
    params = init_encoder_params(k_params, input_dim=D, hidden_size=H)
    x = jax.random.normal(k_x, (B, T, D), dtype=jnp.float32)

    lstm_out, (h_n, c_n) = encoder_forward(x, params)
    jax.block_until_ready((lstm_out, h_n, c_n))

    # Sanity check vs pure-JAX reference.
    ref_out, (ref_h, ref_c) = _reference_lstm(x, params)
    assert lstm_out.shape == (B, T, H)
    assert h_n.shape == (1, B, H) and c_n.shape == (1, B, H)
    assert jnp.allclose(lstm_out, ref_out, atol=3e-5, rtol=1e-4)
    assert jnp.allclose(h_n, ref_h, atol=3e-5, rtol=1e-4)
    assert jnp.allclose(c_n, ref_c, atol=3e-5, rtol=1e-4)

    print("KERNEL_OK")
</pallas_src>

<mosaic_0001>
module attributes {stable_mosaic.version = 11 : i64} {
  func.func @_encoder_lstm_kernel(%arg0: memref<16x4xf32, #tpu.memory_space<vmem>>, %arg1: memref<2x32xf32, #tpu.memory_space<vmem>>, %arg2: memref<2x32xf32, #tpu.memory_space<vmem>>, %arg3: memref<4x128xf32, #tpu.memory_space<vmem>>, %arg4: memref<32x128xf32, #tpu.memory_space<vmem>>, %arg5: memref<1x128xf32, #tpu.memory_space<vmem>>, %arg6: memref<2x256xf32, #tpu.memory_space<vmem>>, %arg7: memref<2x32xf32, #tpu.memory_space<vmem>>, %arg8: memref<2x32xf32, #tpu.memory_space<vmem>>) attributes {dimension_semantics = [], scalar_prefetch = 0 : i64, scratch_operands = 0 : i64, tpu.core_type = #tpu.core_type<tc>} {
    %c0 = arith.constant 0 : index
    %c0_0 = arith.constant 0 : index
    %0 = vector.load %arg0[%c0, %c0_0] : memref<16x4xf32, #tpu.memory_space<vmem>>, vector<16x4xf32>
    %c0_1 = arith.constant 0 : index
    %c0_2 = arith.constant 0 : index
    %1 = vector.load %arg3[%c0_1, %c0_2] : memref<4x128xf32, #tpu.memory_space<vmem>>, vector<4x128xf32>
    %cst = arith.constant dense<0.000000e+00> : vector<16x128xf32>
    %2 = tpu.matmul %0, %1, %cst {dimension_numbers = #tpu.dot_dimension_numbers<[1], [0], [0], [1], [0, 0, 1, 1], [], []>} : vector<16x4xf32>, vector<4x128xf32>, vector<16x128xf32> -> vector<16x128xf32>
    %c0_3 = arith.constant 0 : index
    %c0_4 = arith.constant 0 : index
    %3 = vector.load %arg5[%c0_3, %c0_4] : memref<1x128xf32, #tpu.memory_space<vmem>>, vector<1x128xf32>
    %4 = vector.broadcast %3 : vector<1x128xf32> to vector<16x128xf32>
    %5 = arith.addf %2, %4 : vector<16x128xf32>
    %c0_5 = arith.constant 0 : index
    %c0_6 = arith.constant 0 : index
    %6 = vector.load %arg4[%c0_5, %c0_6] : memref<32x128xf32, #tpu.memory_space<vmem>>, vector<32x128xf32>
    %c0_7 = arith.constant 0 : index
    %c0_8 = arith.constant 0 : index
    %7 = vector.load %arg1[%c0_7, %c0_8] : memref<2x32xf32, #tpu.memory_space<vmem>>, vector<2x32xf32>
    %c0_9 = arith.constant 0 : index
    %c0_10 = arith.constant 0 : index
    %8 = vector.load %arg2[%c0_9, %c0_10] : memref<2x32xf32, #tpu.memory_space<vmem>>, vector<2x32xf32>
    %9 = vector.extract_strided_slice %5 {offsets = [0, 0], sizes = [2, 128], strides = [1, 1]} : vector<16x128xf32> to vector<2x128xf32>
    %cst_11 = arith.constant dense<0.000000e+00> : vector<2x128xf32>
    %10 = tpu.matmul %7, %6, %cst_11 {dimension_numbers = #tpu.dot_dimension_numbers<[1], [0], [0], [1], [0, 0, 1, 1], [], []>} : vector<2x32xf32>, vector<32x128xf32>, vector<2x128xf32> -> vector<2x128xf32>
    %11 = arith.addf %9, %10 : vector<2x128xf32>
    %12 = vector.extract_strided_slice %11 {offsets = [0, 0], sizes = [2, 96], strides = [1, 1]} : vector<2x128xf32> to vector<2x96xf32>
    %13 = arith.negf %12 : vector<2x96xf32>
    %14 = math.exp %13 : vector<2x96xf32>
    %cst_12 = arith.constant 1.000000e+00 : f32
    %15 = vector.broadcast %cst_12 : f32 to vector<2x96xf32>
    %16 = arith.addf %15, %14 : vector<2x96xf32>
    %17 = arith.divf %15, %16 : vector<2x96xf32>
    %18 = vector.extract_strided_slice %11 {offsets = [0, 96], sizes = [2, 32], strides = [1, 1]} : vector<2x128xf32> to vector<2x32xf32>
    %19 = math.tanh %18 : vector<2x32xf32>
    %20 = vector.extract_strided_slice %17 {offsets = [0, 0], sizes = [2, 32], strides = [1, 1]} : vector<2x96xf32> to vector<2x32xf32>
    %21 = vector.extract_strided_slice %17 {offsets = [0, 32], sizes = [2, 32], strides = [1, 1]} : vector<2x96xf32> to vector<2x32xf32>
    %22 = vector.extract_strided_slice %17 {offsets = [0, 64], sizes = [2, 32], strides = [1, 1]} : vector<2x96xf32> to vector<2x32xf32>
    %23 = arith.mulf %21, %8 : vector<2x32xf32>
    %24 = arith.mulf %20, %19 : vector<2x32xf32>
    %25 = arith.addf %23, %24 : vector<2x32xf32>
    %26 = math.tanh %25 : vector<2x32xf32>
    %27 = arith.mulf %22, %26 : vector<2x32xf32>
    %c0_13 = arith.constant 0 : index
    %c0_14 = arith.constant 0 : index
    %28 = vector.load %arg6[%c0_13, %c0_14] : memref<2x256xf32, #tpu.memory_space<vmem>>, vector<2x32xf32>
    tpu.vector_store %arg6[%c0_13, %c0_14], %27 {strides = array<i32>} : memref<2x256xf32, #tpu.memory_space<vmem>>, vector<2x32xf32>,
    %29 = vector.extract_strided_slice %5 {offsets = [2, 0], sizes = [2, 128], strides = [1, 1]} : vector<16x128xf32> to vector<2x128xf32>
    %cst_15 = arith.constant dense<0.000000e+00> : vector<2x128xf32>
    %30 = tpu.matmul %27, %6, %cst_15 {dimension_numbers = #tpu.dot_dimension_numbers<[1], [0], [0], [1], [0, 0, 1, 1], [], []>} : vector<2x32xf32>, vector<32x128xf32>, vector<2x128xf32> -> vector<2x128xf32>
    %31 = arith.addf %29, %30 : vector<2x128xf32>
    %32 = vector.extract_strided_slice %31 {offsets = [0, 0], sizes = [2, 96], strides = [1, 1]} : vector<2x128xf32> to vector<2x96xf32>
    %33 = arith.negf %32 : vector<2x96xf32>
    %34 = math.exp %33 : vector<2x96xf32>
    %cst_16 = arith.constant 1.000000e+00 : f32
    %35 = vector.broadcast %cst_16 : f32 to vector<2x96xf32>
    %36 = arith.addf %35, %34 : vector<2x96xf32>
    %37 = arith.divf %35, %36 : vector<2x96xf32>
    %38 = vector.extract_strided_slice %31 {offsets = [0, 96], sizes = [2, 32], strides = [1, 1]} : vector<2x128xf32> to vector<2x32xf32>
    %39 = math.tanh %38 : vector<2x32xf32>
    %40 = vector.extract_strided_slice %37 {offsets = [0, 0], sizes = [2, 32], strides = [1, 1]} : vector<2x96xf32> to vector<2x32xf32>
    %41 = vector.extract_strided_slice %37 {offsets = [0, 32], sizes = [2, 32], strides = [1, 1]} : vector<2x96xf32> to vector<2x32xf32>
    %42 = vector.extract_strided_slice %37 {offsets = [0, 64], sizes = [2, 32], strides = [1, 1]} : vector<2x96xf32> to vector<2x32xf32>
    %43 = arith.mulf %41, %25 : vector<2x32xf32>
    %44 = arith.mulf %40, %39 : vector<2x32xf32>
    %45 = arith.addf %43, %44 : vector<2x32xf32>
    %46 = math.tanh %45 : vector<2x32xf32>
    %47 = arith.mulf %42, %46 : vector<2x32xf32>
    %c0_17 = arith.constant 0 : index
    %c32 = arith.constant 32 : index
    %48 = vector.load %arg6[%c0_17, %c32] : memref<2x256xf32, #tpu.memory_space<vmem>>, vector<2x32xf32>
    tpu.vector_store %arg6[%c0_17, %c32], %47 {strides = array<i32>} : memref<2x256xf32, #tpu.memory_space<vmem>>, vector<2x32xf32>,
    %49 = vector.extract_strided_slice %5 {offsets = [4, 0], sizes = [2, 128], strides = [1, 1]} : vector<16x128xf32> to vector<2x128xf32>
    %cst_18 = arith.constant dense<0.000000e+00> : vector<2x128xf32>
    %50 = tpu.matmul %47, %6, %cst_18 {dimension_numbers = #tpu.dot_dimension_numbers<[1], [0], [0], [1], [0, 0, 1, 1], [], []>} : vector<2x32xf32>, vector<32x128xf32>, vector<2x128xf32> -> vector<2x128xf32>
    %51 = arith.addf %49, %50 : vector<2x128xf32>
    %52 = vector.extract_strided_slice %51 {offsets = [0, 0], sizes = [2, 96], strides = [1, 1]} : vector<2x128xf32> to vector<2x96xf32>
    %53 = arith.negf %52 : vector<2x96xf32>
    %54 = math.exp %53 : vector<2x96xf32>
    %cst_19 = arith.constant 1.000000e+00 : f32
    %55 = vector.broadcast %cst_19 : f32 to vector<2x96xf32>
    %56 = arith.addf %55, %54 : vector<2x96xf32>
    %57 = arith.divf %55, %56 : vector<2x96xf32>
    %58 = vector.extract_strided_slice %51 {offsets = [0, 96], sizes = [2, 32], strides = [1, 1]} : vector<2x128xf32> to vector<2x32xf32>
    %59 = math.tanh %58 : vector<2x32xf32>
    %60 = vector.extract_strided_slice %57 {offsets = [0, 0], sizes = [2, 32], strides = [1, 1]} : vector<2x96xf32> to vector<2x32xf32>
    %61 = vector.extract_strided_slice %57 {offsets = [0, 32], sizes = [2, 32], strides = [1, 1]} : vector<2x96xf32> to vector<2x32xf32>
    %62 = vector.extract_strided_slice %57 {offsets = [0, 64], sizes = [2, 32], strides = [1, 1]} : vector<2x96xf32> to vector<2x32xf32>
    %63 = arith.mulf %61, %45 : vector<2x32xf32>
    %64 = arith.mulf %60, %59 : vector<2x32xf32>
    %65 = arith.addf %63, %64 : vector<2x32xf32>
    %66 = math.tanh %65 : vector<2x32xf32>
    %67 = arith.mulf %62, %66 : vector<2x32xf32>
    %c0_20 = arith.constant 0 : index
    %c64 = arith.constant 64 : index
    %68 = vector.load %arg6[%c0_20, %c64] : memref<2x256xf32, #tpu.memory_space<vmem>>, vector<2x32xf32>
    tpu.vector_store %arg6[%c0_20, %c64], %67 {strides = array<i32>} : memref<2x256xf32, #tpu.memory_space<vmem>>, vector<2x32xf32>,
    %69 = vector.extract_strided_slice %5 {offsets = [6, 0], sizes = [2, 128], strides = [1, 1]} : vector<16x128xf32> to vector<2x128xf32>
    %cst_21 = arith.constant dense<0.000000e+00> : vector<2x128xf32>
    %70 = tpu.matmul %67, %6, %cst_21 {dimension_numbers = #tpu.dot_dimension_numbers<[1], [0], [0], [1], [0, 0, 1, 1], [], []>} : vector<2x32xf32>, vector<32x128xf32>, vector<2x128xf32> -> vector<2x128xf32>
    %71 = arith.addf %69, %70 : vector<2x128xf32>
    %72 = vector.extract_strided_slice %71 {offsets = [0, 0], sizes = [2, 96], strides = [1, 1]} : vector<2x128xf32> to vector<2x96xf32>
    %73 = arith.negf %72 : vector<2x96xf32>
    %74 = math.exp %73 : vector<2x96xf32>
    %cst_22 = arith.constant 1.000000e+00 : f32
    %75 = vector.broadcast %cst_22 : f32 to vector<2x96xf32>
    %76 = arith.addf %75, %74 : vector<2x96xf32>
    %77 = arith.divf %75, %76 : vector<2x96xf32>
    %78 = vector.extract_strided_slice %71 {offsets = [0, 96], sizes = [2, 32], strides = [1, 1]} : vector<2x128xf32> to vector<2x32xf32>
    %79 = math.tanh %78 : vector<2x32xf32>
    %80 = vector.extract_strided_slice %77 {offsets = [0, 0], sizes = [2, 32], strides = [1, 1]} : vector<2x96xf32> to vector<2x32xf32>
    %81 = vector.extract_strided_slice %77 {offsets = [0, 32], sizes = [2, 32], strides = [1, 1]} : vector<2x96xf32> to vector<2x32xf32>
    %82 = vector.extract_strided_slice %77 {offsets = [0, 64], sizes = [2, 32], strides = [1, 1]} : vector<2x96xf32> to vector<2x32xf32>
    %83 = arith.mulf %81, %65 : vector<2x32xf32>
    %84 = arith.mulf %80, %79 : vector<2x32xf32>
    %85 = arith.addf %83, %84 : vector<2x32xf32>
    %86 = math.tanh %85 : vector<2x32xf32>
    %87 = arith.mulf %82, %86 : vector<2x32xf32>
    %c0_23 = arith.constant 0 : index
    %c96 = arith.constant 96 : index
    %88 = vector.load %arg6[%c0_23, %c96] : memref<2x256xf32, #tpu.memory_space<vmem>>, vector<2x32xf32>
    tpu.vector_store %arg6[%c0_23, %c96], %87 {strides = array<i32>} : memref<2x256xf32, #tpu.memory_space<vmem>>, vector<2x32xf32>,
    %89 = vector.extract_strided_slice %5 {offsets = [8, 0], sizes = [2, 128], strides = [1, 1]} : vector<16x128xf32> to vector<2x128xf32>
    %cst_24 = arith.constant dense<0.000000e+00> : vector<2x128xf32>
    %90 = tpu.matmul %87, %6, %cst_24 {dimension_numbers = #tpu.dot_dimension_numbers<[1], [0], [0], [1], [0, 0, 1, 1], [], []>} : vector<2x32xf32>, vector<32x128xf32>, vector<2x128xf32> -> vector<2x128xf32>
    %91 = arith.addf %89, %90 : vector<2x128xf32>
    %92 = vector.extract_strided_slice %91 {offsets = [0, 0], sizes = [2, 96], strides = [1, 1]} : vector<2x128xf32> to vector<2x96xf32>
    %93 = arith.negf %92 : vector<2x96xf32>
    %94 = math.exp %93 : vector<2x96xf32>
    %cst_25 = arith.constant 1.000000e+00 : f32
    %95 = vector.broadcast %cst_25 : f32 to vector<2x96xf32>
    %96 = arith.addf %95, %94 : vector<2x96xf32>
    %97 = arith.divf %95, %96 : vector<2x96xf32>
    %98 = vector.extract_strided_slice %91 {offsets = [0, 96], sizes = [2, 32], strides = [1, 1]} : vector<2x128xf32> to vector<2x32xf32>
    %99 = math.tanh %98 : vector<2x32xf32>
    %100 = vector.extract_strided_slice %97 {offsets = [0, 0], sizes = [2, 32], strides = [1, 1]} : vector<2x96xf32> to vector<2x32xf32>
    %101 = vector.extract_strided_slice %97 {offsets = [0, 32], sizes = [2, 32], strides = [1, 1]} : vector<2x96xf32> to vector<2x32xf32>
    %102 = vector.extract_strided_slice %97 {offsets = [0, 64], sizes = [2, 32], strides = [1, 1]} : vector<2x96xf32> to vector<2x32xf32>
    %103 = arith.mulf %101, %85 : vector<2x32xf32>
    %104 = arith.mulf %100, %99 : vector<2x32xf32>
    %105 = arith.addf %103, %104 : vector<2x32xf32>
    %106 = math.tanh %105 : vector<2x32xf32>
    %107 = arith.mulf %102, %106 : vector<2x32xf32>
    %c0_26 = arith.constant 0 : index
    %c128 = arith.constant 128 : index
    %108 = vector.load %arg6[%c0_26, %c128] : memref<2x256xf32, #tpu.memory_space<vmem>>, vector<2x32xf32>
    tpu.vector_store %arg6[%c0_26, %c128], %107 {strides = array<i32>} : memref<2x256xf32, #tpu.memory_space<vmem>>, vector<2x32xf32>,
    %109 = vector.extract_strided_slice %5 {offsets = [10, 0], sizes = [2, 128], strides = [1, 1]} : vector<16x128xf32> to vector<2x128xf32>
    %cst_27 = arith.constant dense<0.000000e+00> : vector<2x128xf32>
    %110 = tpu.matmul %107, %6, %cst_27 {dimension_numbers = #tpu.dot_dimension_numbers<[1], [0], [0], [1], [0, 0, 1, 1], [], []>} : vector<2x32xf32>, vector<32x128xf32>, vector<2x128xf32> -> vector<2x128xf32>
    %111 = arith.addf %109, %110 : vector<2x128xf32>
    %112 = vector.extract_strided_slice %111 {offsets = [0, 0], sizes = [2, 96], strides = [1, 1]} : vector<2x128xf32> to vector<2x96xf32>
    %113 = arith.negf %112 : vector<2x96xf32>
    %114 = math.exp %113 : vector<2x96xf32>
    %cst_28 = arith.constant 1.000000e+00 : f32
    %115 = vector.broadcast %cst_28 : f32 to vector<2x96xf32>
    %116 = arith.addf %115, %114 : vector<2x96xf32>
    %117 = arith.divf %115, %116 : vector<2x96xf32>
    %118 = vector.extract_strided_slice %111 {offsets = [0, 96], sizes = [2, 32], strides = [1, 1]} : vector<2x128xf32> to vector<2x32xf32>
    %119 = math.tanh %118 : vector<2x32xf32>
    %120 = vector.extract_strided_slice %117 {offsets = [0, 0], sizes = [2, 32], strides = [1, 1]} : vector<2x96xf32> to vector<2x32xf32>
    %121 = vector.extract_strided_slice %117 {offsets = [0, 32], sizes = [2, 32], strides = [1, 1]} : vector<2x96xf32> to vector<2x32xf32>
    %122 = vector.extract_strided_slice %117 {offsets = [0, 64], sizes = [2, 32], strides = [1, 1]} : vector<2x96xf32> to vector<2x32xf32>
    %123 = arith.mulf %121, %105 : vector<2x32xf32>
    %124 = arith.mulf %120, %119 : vector<2x32xf32>
    %125 = arith.addf %123, %124 : vector<2x32xf32>
    %126 = math.tanh %125 : vector<2x32xf32>
    %127 = arith.mulf %122, %126 : vector<2x32xf32>
    %c0_29 = arith.constant 0 : index
    %c160 = arith.constant 160 : index
    %128 = vector.load %arg6[%c0_29, %c160] : memref<2x256xf32, #tpu.memory_space<vmem>>, vector<2x32xf32>
    tpu.vector_store %arg6[%c0_29, %c160], %127 {strides = array<i32>} : memref<2x256xf32, #tpu.memory_space<vmem>>, vector<2x32xf32>,
    %129 = vector.extract_strided_slice %5 {offsets = [12, 0], sizes = [2, 128], strides = [1, 1]} : vector<16x128xf32> to vector<2x128xf32>
    %cst_30 = arith.constant dense<0.000000e+00> : vector<2x128xf32>
    %130 = tpu.matmul %127, %6, %cst_30 {dimension_numbers = #tpu.dot_dimension_numbers<[1], [0], [0], [1], [0, 0, 1, 1], [], []>} : vector<2x32xf32>, vector<32x128xf32>, vector<2x128xf32> -> vector<2x128xf32>
    %131 = arith.addf %129, %130 : vector<2x128xf32>
    %132 = vector.extract_strided_slice %131 {offsets = [0, 0], sizes = [2, 96], strides = [1, 1]} : vector<2x128xf32> to vector<2x96xf32>
    %133 = arith.negf %132 : vector<2x96xf32>
    %134 = math.exp %133 : vector<2x96xf32>
    %cst_31 = arith.constant 1.000000e+00 : f32
    %135 = vector.broadcast %cst_31 : f32 to vector<2x96xf32>
    %136 = arith.addf %135, %134 : vector<2x96xf32>
    %137 = arith.divf %135, %136 : vector<2x96xf32>
    %138 = vector.extract_strided_slice %131 {offsets = [0, 96], sizes = [2, 32], strides = [1, 1]} : vector<2x128xf32> to vector<2x32xf32>
    %139 = math.tanh %138 : vector<2x32xf32>
    %140 = vector.extract_strided_slice %137 {offsets = [0, 0], sizes = [2, 32], strides = [1, 1]} : vector<2x96xf32> to vector<2x32xf32>
    %141 = vector.extract_strided_slice %137 {offsets = [0, 32], sizes = [2, 32], strides = [1, 1]} : vector<2x96xf32> to vector<2x32xf32>
    %142 = vector.extract_strided_slice %137 {offsets = [0, 64], sizes = [2, 32], strides = [1, 1]} : vector<2x96xf32> to vector<2x32xf32>
    %143 = arith.mulf %141, %125 : vector<2x32xf32>
    %144 = arith.mulf %140, %139 : vector<2x32xf32>
    %145 = arith.addf %143, %144 : vector<2x32xf32>
    %146 = math.tanh %145 : vector<2x32xf32>
    %147 = arith.mulf %142, %146 : vector<2x32xf32>
    %c0_32 = arith.constant 0 : index
    %c192 = arith.constant 192 : index
    %148 = vector.load %arg6[%c0_32, %c192] : memref<2x256xf32, #tpu.memory_space<vmem>>, vector<2x32xf32>
    tpu.vector_store %arg6[%c0_32, %c192], %147 {strides = array<i32>} : memref<2x256xf32, #tpu.memory_space<vmem>>, vector<2x32xf32>,
    %149 = vector.extract_strided_slice %5 {offsets = [14, 0], sizes = [2, 128], strides = [1, 1]} : vector<16x128xf32> to vector<2x128xf32>
    %cst_33 = arith.constant dense<0.000000e+00> : vector<2x128xf32>
    %150 = tpu.matmul %147, %6, %cst_33 {dimension_numbers = #tpu.dot_dimension_numbers<[1], [0], [0], [1], [0, 0, 1, 1], [], []>} : vector<2x32xf32>, vector<32x128xf32>, vector<2x128xf32> -> vector<2x128xf32>
    %151 = arith.addf %149, %150 : vector<2x128xf32>
    %152 = vector.extract_strided_slice %151 {offsets = [0, 0], sizes = [2, 96], strides = [1, 1]} : vector<2x128xf32> to vector<2x96xf32>
    %153 = arith.negf %152 : vector<2x96xf32>
    %154 = math.exp %153 : vector<2x96xf32>
    %cst_34 = arith.constant 1.000000e+00 : f32
    %155 = vector.broadcast %cst_34 : f32 to vector<2x96xf32>
    %156 = arith.addf %155, %154 : vector<2x96xf32>
    %157 = arith.divf %155, %156 : vector<2x96xf32>
    %158 = vector.extract_strided_slice %151 {offsets = [0, 96], sizes = [2, 32], strides = [1, 1]} : vector<2x128xf32> to vector<2x32xf32>
    %159 = math.tanh %158 : vector<2x32xf32>
    %160 = vector.extract_strided_slice %157 {offsets = [0, 0], sizes = [2, 32], strides = [1, 1]} : vector<2x96xf32> to vector<2x32xf32>
    %161 = vector.extract_strided_slice %157 {offsets = [0, 32], sizes = [2, 32], strides = [1, 1]} : vector<2x96xf32> to vector<2x32xf32>
    %162 = vector.extract_strided_slice %157 {offsets = [0, 64], sizes = [2, 32], strides = [1, 1]} : vector<2x96xf32> to vector<2x32xf32>
    %163 = arith.mulf %161, %145 : vector<2x32xf32>
    %164 = arith.mulf %160, %159 : vector<2x32xf32>
    %165 = arith.addf %163, %164 : vector<2x32xf32>
    %166 = math.tanh %165 : vector<2x32xf32>
    %167 = arith.mulf %162, %166 : vector<2x32xf32>
    %c0_35 = arith.constant 0 : index
    %c224 = arith.constant 224 : index
    %168 = vector.load %arg6[%c0_35, %c224] : memref<2x256xf32, #tpu.memory_space<vmem>>, vector<2x32xf32>
    tpu.vector_store %arg6[%c0_35, %c224], %167 {strides = array<i32>} : memref<2x256xf32, #tpu.memory_space<vmem>>, vector<2x32xf32>,
    %c0_36 = arith.constant 0 : index
    %c0_37 = arith.constant 0 : index
    %169 = vector.load %arg7[%c0_36, %c0_37] : memref<2x32xf32, #tpu.memory_space<vmem>>, vector<2x32xf32>
    tpu.vector_store %arg7[%c0_36, %c0_37], %167 {strides = array<i32>} : memref<2x32xf32, #tpu.memory_space<vmem>>, vector<2x32xf32>,
    %c0_38 = arith.constant 0 : index
    %c0_39 = arith.constant 0 : index
    %170 = vector.load %arg8[%c0_38, %c0_39] : memref<2x32xf32, #tpu.memory_space<vmem>>, vector<2x32xf32>
    tpu.vector_store %arg8[%c0_38, %c0_39], %165 {strides = array<i32>} : memref<2x32xf32, #tpu.memory_space<vmem>>, vector<2x32xf32>,
    return
  }
}

</mosaic_0001>

<llo_original>
// kernel: tpu_custom_call.1
$region0: #{tpu_custom_call.1}
  #allocation0 [shape = 'u32[]', space=smem, size = 0x4, offset = 0x4, fixed_abs, tag = 'smem constant byte address 0x4 - core index']
  #allocation1 [shape = 'u32[144,128]{1,0:T(1,128)}', space=vmem, size = 0x12000, scoped, tag = 'internal scratch']
  %s0 = inlined_call_operand.vmem [shape: f32[16,4], index: 0, kind: input, shape index: {}]
  %s1 = inlined_call_operand.vmem [shape: f32[2,32], index: 1, kind: input, shape index: {}]
  %s2 = inlined_call_operand.hbm [shape: f32[2,32], index: 2, kind: input, shape index: {}]
  %s3 = inlined_call_operand.hbm [shape: f32[4,128], index: 3, kind: input, shape index: {}]
  %s4 = inlined_call_operand.vmem [shape: f32[32,128], index: 4, kind: input, shape index: {}]
  %s5 = inlined_call_operand.vmem [shape: f32[1,128], index: 5, kind: input, shape index: {}]
  %s6 = inlined_call_operand.hbm [shape: f32[2,256], index: 6, kind: output, shape index: {0}]
  %s7 = inlined_call_operand.hbm [shape: f32[2,32], index: 7, kind: output, shape index: {1}]
  %s8 = inlined_call_operand.hbm [shape: f32[2,32], index: 8, kind: output, shape index: {2}]
  %9 = xla_tuple %s6, %s7, %s8
  %s10 = sld [smem:[#allocation0]]
  $region58: #{tpu_custom_call.1} parent=0
    _
  %s12 = ssub.s32 1, %s10
  %s13 = scalar_select 0, %s12, %s10
  $region1: #{tpu_custom_call.1} parent=0
    #allocation2 [shape = 'u8[1024]{0}', space=vmem, size = 0x400, scoped, tag = 'input window, operand 2, single buffered']
    #allocation3 [shape = 's32[1]{0}', space=sflag, size = 0x4, scoped, tag = 'scoped memory for tpu_custom_call.1']
    #allocation4 [shape = 's32[1]{0}', space=sflag, size = 0x4, scoped, tag = 'scoped memory for tpu_custom_call.1']
    #allocation5 [shape = 'u8[2048]{0}', space=vmem, size = 0x800, scoped, tag = 'input window, operand 3, single buffered']
    #allocation6 [shape = 's32[1]{0}', space=sflag, size = 0x4, scoped, tag = 'scoped memory for tpu_custom_call.1']
    #allocation7 [shape = 'u8[2048]{0}', space=vmem, size = 0x800, scoped, tag = 'output window, operand 0, single buffered']
    #allocation8 [shape = 'u8[1024]{0}', space=vmem, size = 0x400, scoped, tag = 'output window, operand 1, single buffered']
    #allocation9 [shape = 's32[1]{0}', space=sflag, size = 0x4, scoped, tag = 'scoped memory for tpu_custom_call.1']
    #allocation10 [shape = 'u8[1024]{0}', space=vmem, size = 0x400, scoped, tag = 'output window, operand 2, single buffered']
    %14 = vsyncpa [#allocation3], 0
    %15 = vsyncpa [#allocation6], 0
    %16 = vsyncpa [#allocation4], 0
    %17 = vsyncpa [#allocation9], 0
    // Predicated region
    $region2: #{tpu_custom_call.1} parent=1 // pred_check
      _
    $region3: #{tpu_custom_call.1} parent=1 // pred_check_branch
      %19 = sbr.rel (0) target = $region5
    $region4: #{tpu_custom_call.1} parent=1 // pred_region
      _
    $region5: #{tpu_custom_call.1} parent=1 // pred_fallthru
      _
    // Predicated region
    $region6: #{tpu_custom_call.1} parent=1 // pred_check
      _
    $region7: #{tpu_custom_call.1} parent=1 // pred_check_branch
      %21 = sbr.rel (0) target = $region9
    $region8: #{tpu_custom_call.1} parent=1 // pred_region
      _
    $region9: #{tpu_custom_call.1} parent=1 // pred_fallthru
      _
    // Predicated region
    $region10: #{tpu_custom_call.1} parent=1 // pred_check
      _
    $region11: #{tpu_custom_call.1} parent=1 // pred_check_branch
      %23 = sbr.rel (0) target = $region13
    $region12: #{tpu_custom_call.1} parent=1 // pred_region
      %s25 = ssub.s32 32, 32
      %26 = vsyncadd [#allocation3], %s25
      %s28 = sshll.u32 [#allocation2], 4
      %s29 = int_to_ptr.vmem [resolvable:$true] %s28
      %31 = dma.hbm_to_vmem [thread:$0]  %s2, 32, %s29, [#allocation3]
    $region13: #{tpu_custom_call.1} parent=1 // pred_fallthru
      _
    // Predicated region
    $region14: #{tpu_custom_call.1} parent=1 // pred_check
      _
    $region15: #{tpu_custom_call.1} parent=1 // pred_check_branch
      %33 = sbr.rel (0) target = $region17
    $region16: #{tpu_custom_call.1} parent=1 // pred_region
      %s35 = ssub.s32 64, 64
      %36 = vsyncadd [#allocation6], %s35
      %s38 = sshll.u32 [#allocation5], 4
      %s39 = int_to_ptr.vmem [resolvable:$true] %s38
      %41 = dma.hbm_to_vmem [thread:$0]  %s3, 64, %s39, [#allocation6]
    $region17: #{tpu_custom_call.1} parent=1 // pred_fallthru
      _
    // Predicated region
    $region18: #{tpu_custom_call.1} parent=1 // pred_check
      _
    $region19: #{tpu_custom_call.1} parent=1 // pred_check_branch
      %43 = sbr.rel (0) target = $region21
    $region20: #{tpu_custom_call.1} parent=1 // pred_region
      _
    $region21: #{tpu_custom_call.1} parent=1 // pred_fallthru
      _
    // Predicated region
    $region22: #{tpu_custom_call.1} parent=1 // pred_check
      _
    $region23: #{tpu_custom_call.1} parent=1 // pred_check_branch
      %45 = sbr.rel (0) target = $region25
    $region24: #{tpu_custom_call.1} parent=1 // pred_region
      _
    $region25: #{tpu_custom_call.1} parent=1 // pred_fallthru
      _
    // Predicated region
    $region26: #{tpu_custom_call.1} parent=1 // pred_check
      _
    $region27: #{tpu_custom_call.1} parent=1 // pred_check_branch
      %47 = sbr.rel (0) target = $region29
    $region28: #{tpu_custom_call.1} parent=1 // pred_region
      %48 = dma.done [#allocation3], 32
    $region29: #{tpu_custom_call.1} parent=1 // pred_fallthru
      _
    // Predicated region
    $region30: #{tpu_custom_call.1} parent=1 // pred_check
      _
    $region31: #{tpu_custom_call.1} parent=1 // pred_check_branch
      %50 = sbr.rel (0) target = $region33
    $region32: #{tpu_custom_call.1} parent=1 // pred_region
      %51 = dma.done [#allocation6], 64
    $region33: #{tpu_custom_call.1} parent=1 // pred_fallthru
      _
    %v52 = vld [vmem:[%s0] sm:$0xff]
    %v53 = vld [vmem:[%s0 + $0x8] sm:$0xff]
    %v54 = vld [vmem:[#allocation5] sm:$0xf]
    %v55 = vld [vmem:[%s5] sm:$0x1]
    %v57 = vlaneseq
    %v58 = vshrl.u32 %v57, 7
    %v59 = vsub.s32 0, %v58
    %v60 = vrot.slane %v55, %v59
    %vm62 = vcmask 31744
    %v64 = vsel %vm62, %v52, 0
    %v67 = vsel %vm62, %v53, 0
    %vm69 = vcmask 1043456
    %v71 = vsel %vm69, %v54, 0
    %73 = vmatprep.subr.mxu0 0.0
    %74 = vmatpush1.msra.mxu0 %v71
    %75 = vmatprep.subr.mxu0 0.0
    %76 = vmatpush1.msra.mxu0 0.0
    %77 = vmatprep.subr.mxu0 0.0
    %78 = vmatpush1.msra.mxu0 0.0
    %79 = vmatprep.subr.mxu0 0.0
    %80 = vmatpush1.msra.mxu0 0.0
    %81 = vmatprep.subr.mxu0 0.0
    %82 = vmatpush1.msra.mxu0 0.0
    %83 = vmatprep.subr.mxu0 0.0
    %84 = vmatpush1.msra.mxu0 0.0
    %85 = vmatprep.subr.mxu0 0.0
    %86 = vmatpush1.msra.mxu0 0.0
    %87 = vmatprep.subr.mxu0 0.0
    %88 = vmatpush1.msra.mxu0 0.0
    %89 = vmatprep.subr.mxu0 0.0
    %90 = vmatpush1.msra.mxu0 0.0
    %91 = vmatprep.subr.mxu0 0.0
    %92 = vmatpush1.msra.mxu0 0.0
    %93 = vmatprep.subr.mxu0 0.0
    %94 = vmatpush1.msra.mxu0 0.0
    %95 = vmatprep.subr.mxu0 0.0
    %96 = vmatpush1.msra.mxu0 0.0
    %97 = vmatprep.subr.mxu0 0.0
    %98 = vmatpush1.msra.mxu0 0.0
    %99 = vmatprep.subr.mxu0 0.0
    %100 = vmatpush1.msra.mxu0 0.0
    %101 = vmatprep.subr.mxu0 0.0
    %102 = vmatpush1.msra.mxu0 0.0
    %103 = vmatprep.subr.mxu0 0.0
    %104 = vmatpush1.msra.mxu0 0.0
    %105 = vmatprep.subr.mxu0 0.0
    %106 = vmatpush1.msra.mxu0 0.0
    %107 = vmatprep.subr.mxu0 0.0
    %108 = vmatpush1.msra.mxu0 0.0
    %109 = vmatprep.subr.mxu0 0.0
    %110 = vmatpush1.msra.mxu0 0.0
    %111 = vmatprep.subr.mxu0 0.0
    %112 = vmatpush1.msra.mxu0 0.0
    %113 = vmatprep.subr.mxu0 0.0
    %114 = vmatpush1.msra.mxu0 0.0
    %115 = vmatprep.subr.mxu0 0.0
    %116 = vmatpush1.msra.mxu0 0.0
    %117 = vmatprep.subr.mxu0 0.0
    %118 = vmatpush1.msra.mxu0 0.0
    %119 = vmatprep.subr.mxu0 0.0
    %120 = vmatpush1.msra.mxu0 0.0
    %121 = vmatprep.subr.mxu0 0.0
    %122 = vmatpush1.msra.mxu0 0.0
    %123 = vmatprep.subr.mxu0 0.0
    %124 = vmatpush1.msra.mxu0 0.0
    %125 = vmatprep.subr.mxu0 0.0
    %126 = vmatpush1.msra.mxu0 0.0
    %127 = vmatprep.subr.mxu0 0.0
    %128 = vmatpush1.msra.mxu0 0.0
    %129 = vmatprep.subr.mxu0 0.0
    %130 = vmatpush1.msra.mxu0 0.0
    %131 = vmatprep.subr.mxu0 0.0
    %132 = vmatpush1.msra.mxu0 0.0
    %133 = vmatprep.subr.mxu0 0.0
    %134 = vmatpush1.msra.mxu0 0.0
    %135 = vmatprep.subr.mxu0 0.0
    %136 = vmatpush1.msra.mxu0 0.0
    %137 = vmatprep.mubr.f32.mxu0 0.0
    %138 = vmatmul.mubr.f32.gmra.mrb[0].mxu0 %v64
    %v139 = vpop.f32.mrb[0].mxu0
    %v140 = vadd.f32 %v60, %v139
    %v141 = vpop.f32.mrb[0].mxu0
    %142 = vmatprep.mubr.f32.mxu0 0.0
    %143 = vmatmul.mubr.f32.gmra.mrb[0].mxu0 %v67
    %v144 = vpop.f32.mrb[0].mxu0
    %v145 = vadd.f32 %v60, %v144
    %v146 = vpop.f32.mrb[0].mxu0
    %147 = vdwg.mxu0
    %v148 = vld [vmem:[%s4] sm:$0xff]
    %v149 = vld [vmem:[%s4 + $0x8] sm:$0xff]
    %v150 = vld [vmem:[%s4 + $0x10] sm:$0xff]
    %v151 = vld [vmem:[%s4 + $0x18] sm:$0xff]
    %v152 = vld [vmem:[%s1] sm:$0x3]
    %v153 = vld [vmem:[#allocation2] sm:$0x3]
    %vm154 = vcmask 261120
    %v156 = vsel %vm154, %v152, 0
    %158 = vmatprep.subr.mxu0 0.0
    %159 = vmatpush1.msra.mxu0 %v148
    %160 = vmatprep.subr.mxu0 0.0
    %161 = vmatpush1.msra.mxu0 %v149
    %162 = vmatprep.subr.mxu0 0.0
    %163 = vmatpush1.msra.mxu0 %v150
    %164 = vmatprep.subr.mxu0 0.0
    %165 = vmatpush1.msra.mxu0 %v151
    %166 = vmatprep.subr.mxu0 0.0
    %167 = vmatpush1.msra.mxu0 0.0
    %168 = vmatprep.subr.mxu0 0.0
    %169 = vmatpush1.msra.mxu0 0.0
    %170 = vmatprep.subr.mxu0 0.0
    %171 = vmatpush1.msra.mxu0 0.0
    %172 = vmatprep.subr.mxu0 0.0
    %173 = vmatpush1.msra.mxu0 0.0
    %174 = vmatprep.subr.mxu0 0.0
    %175 = vmatpush1.msra.mxu0 0.0
    %176 = vmatprep.subr.mxu0 0.0
    %177 = vmatpush1.msra.mxu0 0.0
    %178 = vmatprep.subr.mxu0 0.0
    %179 = vmatpush1.msra.mxu0 0.0
    %180 = vmatprep.subr.mxu0 0.0
    %181 = vmatpush1.msra.mxu0 0.0
    %182 = vmatprep.subr.mxu0 0.0
    %183 = vmatpush1.msra.mxu0 0.0
    %184 = vmatprep.subr.mxu0 0.0
    %185 = vmatpush1.msra.mxu0 0.0
    %186 = vmatprep.subr.mxu0 0.0
    %187 = vmatpush1.msra.mxu0 0.0
    %188 = vmatprep.subr.mxu0 0.0
    %189 = vmatpush1.msra.mxu0 0.0
    %190 = vmatprep.subr.mxu0 0.0
    %191 = vmatpush1.msra.mxu0 0.0
    %192 = vmatprep.subr.mxu0 0.0
    %193 = vmatpush1.msra.mxu0 0.0
    %194 = vmatprep.subr.mxu0 0.0
    %195 = vmatpush1.msra.mxu0 0.0
    %196 = vmatprep.subr.mxu0 0.0
    %197 = vmatpush1.msra.mxu0 0.0
    %198 = vmatprep.subr.mxu0 0.0
    %199 = vmatpush1.msra.mxu0 0.0
    %200 = vmatprep.subr.mxu0 0.0
    %201 = vmatpush1.msra.mxu0 0.0
    %202 = vmatprep.subr.mxu0 0.0
    %203 = vmatpush1.msra.mxu0 0.0
    %204 = vmatprep.subr.mxu0 0.0
    %205 = vmatpush1.msra.mxu0 0.0
    %206 = vmatprep.subr.mxu0 0.0
    %207 = vmatpush1.msra.mxu0 0.0
    %208 = vmatprep.subr.mxu0 0.0
    %209 = vmatpush1.msra.mxu0 0.0
    %210 = vmatprep.subr.mxu0 0.0
    %211 = vmatpush1.msra.mxu0 0.0
    %212 = vmatprep.subr.mxu0 0.0
    %213 = vmatpush1.msra.mxu0 0.0
    %214 = vmatprep.subr.mxu0 0.0
    %215 = vmatpush1.msra.mxu0 0.0
    %216 = vmatprep.subr.mxu0 0.0
    %217 = vmatpush1.msra.mxu0 0.0
    %218 = vmatprep.subr.mxu0 0.0
    %219 = vmatpush1.msra.mxu0 0.0
    %220 = vmatprep.subr.mxu0 0.0
    %221 = vmatpush1.msra.mxu0 0.0
    %222 = vmatprep.mubr.f32.mxu0 0.0
    %223 = vmatmul.mubr.f32.gmra.mrb[0].mxu0 %v156
    %v224 = vpop.f32.mrb[0].mxu0
    %v225 = vadd.f32 0.0, %v224
    %v226 = vpop.f32.mrb[0].mxu0
    %227 = vdwg.mxu0
    %v228 = vadd.f32 %v140, %v225
    %v229 = vxor.u32 %v228, 2147483648
    %v230 = vmul.f32 %v229, 1.442695
    %v231 = vpow.pop %v230
    %v232 = vadd.f32 %v231, 1.0
    %v233 = vrcp.pop %v232
    %v234 = vmul.f32 1.0, %v233
    %v235 = vtanh.pop %v228
    %237 = vrot.lane.b32.xlu0 %v153, 32
    %v238 = vpop.permute.xlu0 %237
    %v240 = vmul.f32 %v234, %v238
    %242 = vrot.lane.b32.xlu0 %v235, 32
    %v243 = vpop.permute.xlu0 %242
    %v245 = vmul.f32 %v234, %v243
    %247 = vrot.lane.b32.xlu0 %v245, 32
    %v248 = vpop.permute.xlu0 %247
    %v250 = vadd.f32 %v240, %v248
    %v251 = vtanh.pop %v250
    %253 = vrot.lane.b32.xlu0 %v251, 32
    %v254 = vpop.permute.xlu0 %253
    %v256 = vmul.f32 %v234, %v254
    %v259 = vunpack.c.l.s4 1983009808
    %v260 = vunpack.c.0.s8 %v259
    %v261 = vlaneseq
    %v262 = vshrl.u32 %v261, 7
    %v263 = vsub.s32 %v260, %v262
    %v264 = vrot.slane %v256, %v263
    %265 = vrot.lane.b32.xlu0 %v264, 64
    %v266 = vpop.permute.xlu0 %265
    %vm268 = vcmask 254976
    %269 = vst.msk [vmem:[#allocation7] sm:$0x3] %vm268, %v266
    %270 = vrot.lane.b32.xlu0 %v256, 64
    %v271 = vpop.permute.xlu0 %270
    %v272 = vsel %vm154, %v271, 0
    %274 = vmatprep.subr.mxu0 0.0
    %275 = vmatpush1.msra.mxu0 %v148
    %276 = vmatprep.subr.mxu0 0.0
    %277 = vmatpush1.msra.mxu0 %v149
    %278 = vmatprep.subr.mxu0 0.0
    %279 = vmatpush1.msra.mxu0 %v150
    %280 = vmatprep.subr.mxu0 0.0
    %281 = vmatpush1.msra.mxu0 %v151
    %282 = vmatprep.subr.mxu0 0.0
    %283 = vmatpush1.msra.mxu0 0.0
    %284 = vmatprep.subr.mxu0 0.0
    %285 = vmatpush1.msra.mxu0 0.0
    %286 = vmatprep.subr.mxu0 0.0
    %287 = vmatpush1.msra.mxu0 0.0
    %288 = vmatprep.subr.mxu0 0.0
    %289 = vmatpush1.msra.mxu0 0.0
    %290 = vmatprep.subr.mxu0 0.0
    %291 = vmatpush1.msra.mxu0 0.0
    %292 = vmatprep.subr.mxu0 0.0
    %293 = vmatpush1.msra.mxu0 0.0
    %294 = vmatprep.subr.mxu0 0.0
    %295 = vmatpush1.msra.mxu0 0.0
    %296 = vmatprep.subr.mxu0 0.0
    %297 = vmatpush1.msra.mxu0 0.0
    %298 = vmatprep.subr.mxu0 0.0
    %299 = vmatpush1.msra.mxu0 0.0
    %300 = vmatprep.subr.mxu0 0.0
    %301 = vmatpush1.msra.mxu0 0.0
    %302 = vmatprep.subr.mxu0 0.0
    %303 = vmatpush1.msra.mxu0 0.0
    %304 = vmatprep.subr.mxu0 0.0
    %305 = vmatpush1.msra.mxu0 0.0
    %306 = vmatprep.subr.mxu0 0.0
    %307 = vmatpush1.msra.mxu0 0.0
    %308 = vmatprep.subr.mxu0 0.0
    %309 = vmatpush1.msra.mxu0 0.0
    %310 = vmatprep.subr.mxu0 0.0
    %311 = vmatpush1.msra.mxu0 0.0
    %312 = vmatprep.subr.mxu0 0.0
    %313 = vmatpush1.msra.mxu0 0.0
    %314 = vmatprep.subr.mxu0 0.0
    %315 = vmatpush1.msra.mxu0 0.0
    %316 = vmatprep.subr.mxu0 0.0
    %317 = vmatpush1.msra.mxu0 0.0
    %318 = vmatprep.subr.mxu0 0.0
    %319 = vmatpush1.msra.mxu0 0.0
    %320 = vmatprep.subr.mxu0 0.0
    %321 = vmatpush1.msra.mxu0 0.0
    %322 = vmatprep.subr.mxu0 0.0
    %323 = vmatpush1.msra.mxu0 0.0
    %324 = vmatprep.subr.mxu0 0.0
    %325 = vmatpush1.msra.mxu0 0.0
    %326 = vmatprep.subr.mxu0 0.0
    %327 = vmatpush1.msra.mxu0 0.0
    %328 = vmatprep.subr.mxu0 0.0
    %329 = vmatpush1.msra.mxu0 0.0
    %330 = vmatprep.subr.mxu0 0.0
    %331 = vmatpush1.msra.mxu0 0.0
    %332 = vmatprep.subr.mxu0 0.0
    %333 = vmatpush1.msra.mxu0 0.0
    %334 = vmatprep.subr.mxu0 0.0
    %335 = vmatpush1.msra.mxu0 0.0
    %336 = vmatprep.subr.mxu0 0.0
    %337 = vmatpush1.msra.mxu0 0.0
    %338 = vmatprep.mubr.f32.mxu0 0.0
    %339 = vmatmul.mubr.f32.gmra.mrb[0].mxu0 %v272
    %v340 = vpop.f32.mrb[0].mxu0
    %v341 = vadd.f32 0.0, %v340
    %v342 = vpop.f32.mrb[0].mxu0
    %343 = vdwg.mxu0
    %v345 = vrot.slane %v341, 6
    %v347 = vadd.f32 %v140, %v345
    %v348 = vxor.u32 %v347, 2147483648
    %v349 = vmul.f32 %v348, 1.442695
    %v350 = vpow.pop %v349
    %v351 = vadd.f32 %v350, 1.0
    %v352 = vrcp.pop %v351
    %v353 = vmul.f32 1.0, %v352
    %v354 = vtanh.pop %v347
    %v356 = vrot.slane %v250, 6
    %v358 = vmul.f32 %v353, %v356
    %360 = vrot.lane.b32.xlu0 %v354, 32
    %v361 = vpop.permute.xlu0 %360
    %v363 = vmul.f32 %v353, %v361
    %365 = vrot.lane.b32.xlu0 %v363, 32
    %v366 = vpop.permute.xlu0 %365
    %v368 = vadd.f32 %v358, %v366
    %v369 = vtanh.pop %v368
    %371 = vrot.lane.b32.xlu0 %v369, 32
    %v372 = vpop.permute.xlu0 %371
    %v374 = vmul.f32 %v353, %v372
    %v377 = vunpack.c.l.s4 1983009808
    %v378 = vunpack.c.0.s8 %v377
    %v379 = vlaneseq
    %v380 = vshrl.u32 %v379, 7
    %v381 = vsub.s32 %v378, %v380
    %v382 = vrot.slane %v374, %v381
    %v383 = vcombine.high %v382, %v382
    %384 = vrot.lane.b32.xlu0 %v383, 96
    %v385 = vpop.permute.xlu0 %384
    %vm387 = vcmask 517376
    %388 = vst.msk [vmem:[#allocation7] sm:$0x3] %vm387, %v385
    %v389 = vrot.slane %v374, 2
    %390 = vrot.lane.b32.xlu0 %v389, 64
    %v391 = vpop.permute.xlu0 %390
    %v392 = vsel %vm154, %v391, 0
    %394 = vmatprep.subr.mxu0 0.0
    %395 = vmatpush1.msra.mxu0 %v148
    %396 = vmatprep.subr.mxu0 0.0
    %397 = vmatpush1.msra.mxu0 %v149
    %398 = vmatprep.subr.mxu0 0.0
    %399 = vmatpush1.msra.mxu0 %v150
    %400 = vmatprep.subr.mxu0 0.0
    %401 = vmatpush1.msra.mxu0 %v151
    %402 = vmatprep.subr.mxu0 0.0
    %403 = vmatpush1.msra.mxu0 0.0
    %404 = vmatprep.subr.mxu0 0.0
    %405 = vmatpush1.msra.mxu0 0.0
    %406 = vmatprep.subr.mxu0 0.0
    %407 = vmatpush1.msra.mxu0 0.0
    %408 = vmatprep.subr.mxu0 0.0
    %409 = vmatpush1.msra.mxu0 0.0
    %410 = vmatprep.subr.mxu0 0.0
    %411 = vmatpush1.msra.mxu0 0.0
    %412 = vmatprep.subr.mxu0 0.0
    %413 = vmatpush1.msra.mxu0 0.0
    %414 = vmatprep.subr.mxu0 0.0
    %415 = vmatpush1.msra.mxu0 0.0
    %416 = vmatprep.subr.mxu0 0.0
    %417 = vmatpush1.msra.mxu0 0.0
    %418 = vmatprep.subr.mxu0 0.0
    %419 = vmatpush1.msra.mxu0 0.0
    %420 = vmatprep.subr.mxu0 0.0
    %421 = vmatpush1.msra.mxu0 0.0
    %422 = vmatprep.subr.mxu0 0.0
    %423 = vmatpush1.msra.mxu0 0.0
    %424 = vmatprep.subr.mxu0 0.0
    %425 = vmatpush1.msra.mxu0 0.0
    %426 = vmatprep.subr.mxu0 0.0
    %427 = vmatpush1.msra.mxu0 0.0
    %428 = vmatprep.subr.mxu0 0.0
    %429 = vmatpush1.msra.mxu0 0.0
    %430 = vmatprep.subr.mxu0 0.0
    %431 = vmatpush1.msra.mxu0 0.0
    %432 = vmatprep.subr.mxu0 0.0
    %433 = vmatpush1.msra.mxu0 0.0
    %434 = vmatprep.subr.mxu0 0.0
    %435 = vmatpush1.msra.mxu0 0.0
    %436 = vmatprep.subr.mxu0 0.0
    %437 = vmatpush1.msra.mxu0 0.0
    %438 = vmatprep.subr.mxu0 0.0
    %439 = vmatpush1.msra.mxu0 0.0
    %440 = vmatprep.subr.mxu0 0.0
    %441 = vmatpush1.msra.mxu0 0.0
    %442 = vmatprep.subr.mxu0 0.0
    %443 = vmatpush1.msra.mxu0 0.0
    %444 = vmatprep.subr.mxu0 0.0
    %445 = vmatpush1.msra.mxu0 0.0
    %446 = vmatprep.subr.mxu0 0.0
    %447 = vmatpush1.msra.mxu0 0.0
    %448 = vmatprep.subr.mxu0 0.0
    %449 = vmatpush1.msra.mxu0 0.0
    %450 = vmatprep.subr.mxu0 0.0
    %451 = vmatpush1.msra.mxu0 0.0
    %452 = vmatprep.subr.mxu0 0.0
    %453 = vmatpush1.msra.mxu0 0.0
    %454 = vmatprep.subr.mxu0 0.0
    %455 = vmatpush1.msra.mxu0 0.0
    %456 = vmatprep.subr.mxu0 0.0
    %457 = vmatpush1.msra.mxu0 0.0
    %458 = vmatprep.mubr.f32.mxu0 0.0
    %459 = vmatmul.mubr.f32.gmra.mrb[0].mxu0 %v392
    %v460 = vpop.f32.mrb[0].mxu0
    %v461 = vadd.f32 0.0, %v460
    %v462 = vpop.f32.mrb[0].mxu0
    %463 = vdwg.mxu0
    %v465 = vrot.slane %v461, 4
    %v467 = vadd.f32 %v140, %v465
    %v468 = vxor.u32 %v467, 2147483648
    %v469 = vmul.f32 %v468, 1.442695
    %v470 = vpow.pop %v469
    %v471 = vadd.f32 %v470, 1.0
    %v472 = vrcp.pop %v471
    %v473 = vmul.f32 1.0, %v472
    %v474 = vtanh.pop %v467
    %v476 = vrot.slane %v368, 6
    %v478 = vmul.f32 %v473, %v476
    %480 = vrot.lane.b32.xlu0 %v474, 32
    %v481 = vpop.permute.xlu0 %480
    %v483 = vmul.f32 %v473, %v481
    %485 = vrot.lane.b32.xlu0 %v483, 32
    %v486 = vpop.permute.xlu0 %485
    %v488 = vadd.f32 %v478, %v486
    %v489 = vtanh.pop %v488
    %491 = vrot.lane.b32.xlu0 %v489, 32
    %v492 = vpop.permute.xlu0 %491
    %v494 = vmul.f32 %v473, %v492
    %v496 = vcombine.high %v494, %v494
    %v498 = vunpack.c.l.s4 1983009808
    %v499 = vunpack.c.0.s8 %v498
    %v500 = vlaneseq
    %v501 = vshrl.u32 %v500, 7
    %v502 = vsub.s32 %v499, %v501
    %v503 = vrot.slane %v496, %v502
    %vm505 = vcmask 779776
    %506 = vst.msk [vmem:[#allocation7] sm:$0x3] %vm505, %v503
    %v507 = vrot.slane %v494, 4
    %508 = vrot.lane.b32.xlu0 %v507, 64
    %v509 = vpop.permute.xlu0 %508
    %v510 = vsel %vm154, %v509, 0
    %512 = vmatprep.subr.mxu0 0.0
    %513 = vmatpush1.msra.mxu0 %v148
    %514 = vmatprep.subr.mxu0 0.0
    %515 = vmatpush1.msra.mxu0 %v149
    %516 = vmatprep.subr.mxu0 0.0
    %517 = vmatpush1.msra.mxu0 %v150
    %518 = vmatprep.subr.mxu0 0.0
    %519 = vmatpush1.msra.mxu0 %v151
    %520 = vmatprep.subr.mxu0 0.0
    %521 = vmatpush1.msra.mxu0 0.0
    %522 = vmatprep.subr.mxu0 0.0
    %523 = vmatpush1.msra.mxu0 0.0
    %524 = vmatprep.subr.mxu0 0.0
    %525 = vmatpush1.msra.mxu0 0.0
    %526 = vmatprep.subr.mxu0 0.0
    %527 = vmatpush1.msra.mxu0 0.0
    %528 = vmatprep.subr.mxu0 0.0
    %529 = vmatpush1.msra.mxu0 0.0
    %530 = vmatprep.subr.mxu0 0.0
    %531 = vmatpush1.msra.mxu0 0.0
    %532 = vmatprep.subr.mxu0 0.0
    %533 = vmatpush1.msra.mxu0 0.0
    %534 = vmatprep.subr.mxu0 0.0
    %535 = vmatpush1.msra.mxu0 0.0
    %536 = vmatprep.subr.mxu0 0.0
    %537 = vmatpush1.msra.mxu0 0.0
    %538 = vmatprep.subr.mxu0 0.0
    %539 = vmatpush1.msra.mxu0 0.0
    %540 = vmatprep.subr.mxu0 0.0
    %541 = vmatpush1.msra.mxu0 0.0
    %542 = vmatprep.subr.mxu0 0.0
    %543 = vmatpush1.msra.mxu0 0.0
    %544 = vmatprep.subr.mxu0 0.0
    %545 = vmatpush1.msra.mxu0 0.0
    %546 = vmatprep.subr.mxu0 0.0
    %547 = vmatpush1.msra.mxu0 0.0
    %548 = vmatprep.subr.mxu0 0.0
    %549 = vmatpush1.msra.mxu0 0.0
    %550 = vmatprep.subr.mxu0 0.0
    %551 = vmatpush1.msra.mxu0 0.0
    %552 = vmatprep.subr.mxu0 0.0
    %553 = vmatpush1.msra.mxu0 0.0
    %554 = vmatprep.subr.mxu0 0.0
    %555 = vmatpush1.msra.mxu0 0.0
    %556 = vmatprep.subr.mxu0 0.0
    %557 = vmatpush1.msra.mxu0 0.0
    %558 = vmatprep.subr.mxu0 0.0
    %559 = vmatpush1.msra.mxu0 0.0
    %560 = vmatprep.subr.mxu0 0.0
    %561 = vmatpush1.msra.mxu0 0.0
    %562 = vmatprep.subr.mxu0 0.0
    %563 = vmatpush1.msra.mxu0 0.0
    %564 = vmatprep.subr.mxu0 0.0
    %565 = vmatpush1.msra.mxu0 0.0
    %566 = vmatprep.subr.mxu0 0.0
    %567 = vmatpush1.msra.mxu0 0.0
    %568 = vmatprep.subr.mxu0 0.0
    %569 = vmatpush1.msra.mxu0 0.0
    %570 = vmatprep.subr.mxu0 0.0
    %571 = vmatpush1.msra.mxu0 0.0
    %572 = vmatprep.subr.mxu0 0.0
    %573 = vmatpush1.msra.mxu0 0.0
    %574 = vmatprep.subr.mxu0 0.0
    %575 = vmatpush1.msra.mxu0 0.0
    %576 = vmatprep.mubr.f32.mxu0 0.0
    %577 = vmatmul.mubr.f32.gmra.mrb[0].mxu0 %v510
    %v578 = vpop.f32.mrb[0].mxu0
    %v579 = vadd.f32 0.0, %v578
    %v580 = vpop.f32.mrb[0].mxu0
    %581 = vdwg.mxu0
    %v583 = vrot.slane %v579, 2
    %v585 = vadd.f32 %v140, %v583
    %v586 = vxor.u32 %v585, 2147483648
    %v587 = vmul.f32 %v586, 1.442695
    %v588 = vpow.pop %v587
    %v589 = vadd.f32 %v588, 1.0
    %v590 = vrcp.pop %v589
    %v591 = vmul.f32 1.0, %v590
    %v592 = vtanh.pop %v585
    %v594 = vrot.slane %v488, 6
    %v596 = vmul.f32 %v591, %v594
    %598 = vrot.lane.b32.xlu0 %v592, 32
    %v599 = vpop.permute.xlu0 %598
    %v601 = vmul.f32 %v591, %v599
    %603 = vrot.lane.b32.xlu0 %v601, 32
    %v604 = vpop.permute.xlu0 %603
    %v606 = vadd.f32 %v596, %v604
    %v607 = vtanh.pop %v606
    %609 = vrot.lane.b32.xlu0 %v607, 32
    %v610 = vpop.permute.xlu0 %609
    %v612 = vmul.f32 %v591, %v610
    %v614 = vcombine.high %v612, %v612
    %v616 = vunpack.c.l.s4 1983009808
    %v617 = vunpack.c.0.s8 %v616
    %v618 = vlaneseq
    %v619 = vshrl.u32 %v618, 7
    %v620 = vsub.s32 %v617, %v619
    %v621 = vrot.slane %v614, %v620
    %v622 = vcombine.high %v621, %v621
    %623 = vrot.lane.b32.xlu0 %v622, 32
    %v624 = vpop.permute.xlu0 %623
    %vm626 = vcmask 1042176
    %627 = vst.msk [vmem:[#allocation7] sm:$0x3] %vm626, %v624
    %v628 = vrot.slane %v612, 6
    %629 = vrot.lane.b32.xlu0 %v628, 64
    %v630 = vpop.permute.xlu0 %629
    %v631 = vsel %vm154, %v630, 0
    %633 = vmatprep.subr.mxu0 0.0
    %634 = vmatpush1.msra.mxu0 %v148
    %635 = vmatprep.subr.mxu0 0.0
    %636 = vmatpush1.msra.mxu0 %v149
    %637 = vmatprep.subr.mxu0 0.0
    %638 = vmatpush1.msra.mxu0 %v150
    %639 = vmatprep.subr.mxu0 0.0
    %640 = vmatpush1.msra.mxu0 %v151
    %641 = vmatprep.subr.mxu0 0.0
    %642 = vmatpush1.msra.mxu0 0.0
    %643 = vmatprep.subr.mxu0 0.0
    %644 = vmatpush1.msra.mxu0 0.0
    %645 = vmatprep.subr.mxu0 0.0
    %646 = vmatpush1.msra.mxu0 0.0
    %647 = vmatprep.subr.mxu0 0.0
    %648 = vmatpush1.msra.mxu0 0.0
    %649 = vmatprep.subr.mxu0 0.0
    %650 = vmatpush1.msra.mxu0 0.0
    %651 = vmatprep.subr.mxu0 0.0
    %652 = vmatpush1.msra.mxu0 0.0
    %653 = vmatprep.subr.mxu0 0.0
    %654 = vmatpush1.msra.mxu0 0.0
    %655 = vmatprep.subr.mxu0 0.0
    %656 = vmatpush1.msra.mxu0 0.0
    %657 = vmatprep.subr.mxu0 0.0
    %658 = vmatpush1.msra.mxu0 0.0
    %659 = vmatprep.subr.mxu0 0.0
    %660 = vmatpush1.msra.mxu0 0.0
    %661 = vmatprep.subr.mxu0 0.0
    %662 = vmatpush1.msra.mxu0 0.0
    %663 = vmatprep.subr.mxu0 0.0
    %664 = vmatpush1.msra.mxu0 0.0
    %665 = vmatprep.subr.mxu0 0.0
    %666 = vmatpush1.msra.mxu0 0.0
    %667 = vmatprep.subr.mxu0 0.0
    %668 = vmatpush1.msra.mxu0 0.0
    %669 = vmatprep.subr.mxu0 0.0
    %670 = vmatpush1.msra.mxu0 0.0
    %671 = vmatprep.subr.mxu0 0.0
    %672 = vmatpush1.msra.mxu0 0.0
    %673 = vmatprep.subr.mxu0 0.0
    %674 = vmatpush1.msra.mxu0 0.0
    %675 = vmatprep.subr.mxu0 0.0
    %676 = vmatpush1.msra.mxu0 0.0
    %677 = vmatprep.subr.mxu0 0.0
    %678 = vmatpush1.msra.mxu0 0.0
    %679 = vmatprep.subr.mxu0 0.0
    %680 = vmatpush1.msra.mxu0 0.0
    %681 = vmatprep.subr.mxu0 0.0
    %682 = vmatpush1.msra.mxu0 0.0
    %683 = vmatprep.subr.mxu0 0.0
    %684 = vmatpush1.msra.mxu0 0.0
    %685 = vmatprep.subr.mxu0 0.0
    %686 = vmatpush1.msra.mxu0 0.0
    %687 = vmatprep.subr.mxu0 0.0
    %688 = vmatpush1.msra.mxu0 0.0
    %689 = vmatprep.subr.mxu0 0.0
    %690 = vmatpush1.msra.mxu0 0.0
    %691 = vmatprep.subr.mxu0 0.0
    %692 = vmatpush1.msra.mxu0 0.0
    %693 = vmatprep.subr.mxu0 0.0
    %694 = vmatpush1.msra.mxu0 0.0
    %695 = vmatprep.subr.mxu0 0.0
    %696 = vmatpush1.msra.mxu0 0.0
    %697 = vmatprep.mubr.f32.mxu0 0.0
    %698 = vmatmul.mubr.f32.gmra.mrb[0].mxu0 %v631
    %v699 = vpop.f32.mrb[0].mxu0
    %v700 = vadd.f32 0.0, %v699
    %v701 = vpop.f32.mrb[0].mxu0
    %702 = vdwg.mxu0
    %v703 = vadd.f32 %v145, %v700
    %v704 = vxor.u32 %v703, 2147483648
    %v705 = vmul.f32 %v704, 1.442695
    %v706 = vpow.pop %v705
    %v707 = vadd.f32 %v706, 1.0
    %v708 = vrcp.pop %v707
    %v709 = vmul.f32 1.0, %v708
    %v710 = vtanh.pop %v703
    %v712 = vrot.slane %v606, 6
    %v714 = vmul.f32 %v709, %v712
    %716 = vrot.lane.b32.xlu0 %v710, 32
    %v717 = vpop.permute.xlu0 %716
    %v719 = vmul.f32 %v709, %v717
    %721 = vrot.lane.b32.xlu0 %v719, 32
    %v722 = vpop.permute.xlu0 %721
    %v724 = vadd.f32 %v714, %v722
    %v725 = vtanh.pop %v724
    %727 = vrot.lane.b32.xlu0 %v725, 32
    %v728 = vpop.permute.xlu0 %727
    %v730 = vmul.f32 %v709, %v728
    %v733 = vunpack.c.l.s4 1983009808
    %v734 = vunpack.c.0.s8 %v733
    %v735 = vlaneseq
    %v736 = vshrl.u32 %v735, 7
    %v737 = vsub.s32 %v734, %v736
    %v738 = vrot.slane %v730, %v737
    %739 = vrot.lane.b32.xlu0 %v738, 64
    %v740 = vpop.permute.xlu0 %739
    %742 = vst.msk [vmem:[#allocation7 + $0x2] sm:$0x3] %vm268, %v740
    %743 = vrot.lane.b32.xlu0 %v730, 64
    %v744 = vpop.permute.xlu0 %743
    %v745 = vsel %vm154, %v744, 0
    %747 = vmatprep.subr.mxu0 0.0
    %748 = vmatpush1.msra.mxu0 %v148
    %749 = vmatprep.subr.mxu0 0.0
    %750 = vmatpush1.msra.mxu0 %v149
    %751 = vmatprep.subr.mxu0 0.0
    %752 = vmatpush1.msra.mxu0 %v150
    %753 = vmatprep.subr.mxu0 0.0
    %754 = vmatpush1.msra.mxu0 %v151
    %755 = vmatprep.subr.mxu0 0.0
    %756 = vmatpush1.msra.mxu0 0.0
    %757 = vmatprep.subr.mxu0 0.0
    %758 = vmatpush1.msra.mxu0 0.0
    %759 = vmatprep.subr.mxu0 0.0
    %760 = vmatpush1.msra.mxu0 0.0
    %761 = vmatprep.subr.mxu0 0.0
    %762 = vmatpush1.msra.mxu0 0.0
    %763 = vmatprep.subr.mxu0 0.0
    %764 = vmatpush1.msra.mxu0 0.0
    %765 = vmatprep.subr.mxu0 0.0
    %766 = vmatpush1.msra.mxu0 0.0
    %767 = vmatprep.subr.mxu0 0.0
    %768 = vmatpush1.msra.mxu0 0.0
    %769 = vmatprep.subr.mxu0 0.0
    %770 = vmatpush1.msra.mxu0 0.0
    %771 = vmatprep.subr.mxu0 0.0
    %772 = vmatpush1.msra.mxu0 0.0
    %773 = vmatprep.subr.mxu0 0.0
    %774 = vmatpush1.msra.mxu0 0.0
    %775 = vmatprep.subr.mxu0 0.0
    %776 = vmatpush1.msra.mxu0 0.0
    %777 = vmatprep.subr.mxu0 0.0
    %778 = vmatpush1.msra.mxu0 0.0
    %779 = vmatprep.subr.mxu0 0.0
    %780 = vmatpush1.msra.mxu0 0.0
    %781 = vmatprep.subr.mxu0 0.0
    %782 = vmatpush1.msra.mxu0 0.0
    %783 = vmatprep.subr.mxu0 0.0
    %784 = vmatpush1.msra.mxu0 0.0
    %785 = vmatprep.subr.mxu0 0.0
    %786 = vmatpush1.msra.mxu0 0.0
    %787 = vmatprep.subr.mxu0 0.0
    %788 = vmatpush1.msra.mxu0 0.0
    %789 = vmatprep.subr.mxu0 0.0
    %790 = vmatpush1.msra.mxu0 0.0
    %791 = vmatprep.subr.mxu0 0.0
    %792 = vmatpush1.msra.mxu0 0.0
    %793 = vmatprep.subr.mxu0 0.0
    %794 = vmatpush1.msra.mxu0 0.0
    %795 = vmatprep.subr.mxu0 0.0
    %796 = vmatpush1.msra.mxu0 0.0
    %797 = vmatprep.subr.mxu0 0.0
    %798 = vmatpush1.msra.mxu0 0.0
    %799 = vmatprep.subr.mxu0 0.0
    %800 = vmatpush1.msra.mxu0 0.0
    %801 = vmatprep.subr.mxu0 0.0
    %802 = vmatpush1.msra.mxu0 0.0
    %803 = vmatprep.subr.mxu0 0.0
    %804 = vmatpush1.msra.mxu0 0.0
    %805 = vmatprep.subr.mxu0 0.0
    %806 = vmatpush1.msra.mxu0 0.0
    %807 = vmatprep.subr.mxu0 0.0
    %808 = vmatpush1.msra.mxu0 0.0
    %809 = vmatprep.subr.mxu0 0.0
    %810 = vmatpush1.msra.mxu0 0.0
    %811 = vmatprep.mubr.f32.mxu0 0.0
    %812 = vmatmul.mubr.f32.gmra.mrb[0].mxu0 %v745
    %v813 = vpop.f32.mrb[0].mxu0
    %v814 = vadd.f32 0.0, %v813
    %v815 = vpop.f32.mrb[0].mxu0
    %816 = vdwg.mxu0
    %v818 = vrot.slane %v814, 6
    %v820 = vadd.f32 %v145, %v818
    %v821 = vxor.u32 %v820, 2147483648
    %v822 = vmul.f32 %v821, 1.442695
    %v823 = vpow.pop %v822
    %v824 = vadd.f32 %v823, 1.0
    %v825 = vrcp.pop %v824
    %v826 = vmul.f32 1.0, %v825
    %v827 = vtanh.pop %v820
    %v829 = vrot.slane %v724, 6
    %v831 = vmul.f32 %v826, %v829
    %833 = vrot.lane.b32.xlu0 %v827, 32
    %v834 = vpop.permute.xlu0 %833
    %v836 = vmul.f32 %v826, %v834
    %838 = vrot.lane.b32.xlu0 %v836, 32
    %v839 = vpop.permute.xlu0 %838
    %v841 = vadd.f32 %v831, %v839
    %v842 = vtanh.pop %v841
    %844 = vrot.lane.b32.xlu0 %v842, 32
    %v845 = vpop.permute.xlu0 %844
    %v847 = vmul.f32 %v826, %v845
    %v850 = vunpack.c.l.s4 1983009808
    %v851 = vunpack.c.0.s8 %v850
    %v852 = vlaneseq
    %v853 = vshrl.u32 %v852, 7
    %v854 = vsub.s32 %v851, %v853
    %v855 = vrot.slane %v847, %v854
    %v856 = vcombine.high %v855, %v855
    %857 = vrot.lane.b32.xlu0 %v856, 96
    %v858 = vpop.permute.xlu0 %857
    %860 = vst.msk [vmem:[#allocation7 + $0x2] sm:$0x3] %vm387, %v858
    %v861 = vrot.slane %v847, 2
    %862 = vrot.lane.b32.xlu0 %v861, 64
    %v863 = vpop.permute.xlu0 %862
    %v864 = vsel %vm154, %v863, 0
    %866 = vmatprep.subr.mxu0 0.0
    %867 = vmatpush1.msra.mxu0 %v148
    %868 = vmatprep.subr.mxu0 0.0
    %869 = vmatpush1.msra.mxu0 %v149
    %870 = vmatprep.subr.mxu0 0.0
    %871 = vmatpush1.msra.mxu0 %v150
    %872 = vmatprep.subr.mxu0 0.0
    %873 = vmatpush1.msra.mxu0 %v151
    %874 = vmatprep.subr.mxu0 0.0
    %875 = vmatpush1.msra.mxu0 0.0
    %876 = vmatprep.subr.mxu0 0.0
    %877 = vmatpush1.msra.mxu0 0.0
    %878 = vmatprep.subr.mxu0 0.0
    %879 = vmatpush1.msra.mxu0 0.0
    %880 = vmatprep.subr.mxu0 0.0
    %881 = vmatpush1.msra.mxu0 0.0
    %882 = vmatprep.subr.mxu0 0.0
    %883 = vmatpush1.msra.mxu0 0.0
    %884 = vmatprep.subr.mxu0 0.0
    %885 = vmatpush1.msra.mxu0 0.0
    %886 = vmatprep.subr.mxu0 0.0
    %887 = vmatpush1.msra.mxu0 0.0
    %888 = vmatprep.subr.mxu0 0.0
    %889 = vmatpush1.msra.mxu0 0.0
    %890 = vmatprep.subr.mxu0 0.0
    %891 = vmatpush1.msra.mxu0 0.0
    %892 = vmatprep.subr.mxu0 0.0
    %893 = vmatpush1.msra.mxu0 0.0
    %894 = vmatprep.subr.mxu0 0.0
    %895 = vmatpush1.msra.mxu0 0.0
    %896 = vmatprep.subr.mxu0 0.0
    %897 = vmatpush1.msra.mxu0 0.0
    %898 = vmatprep.subr.mxu0 0.0
    %899 = vmatpush1.msra.mxu0 0.0
    %900 = vmatprep.subr.mxu0 0.0
    %901 = vmatpush1.msra.mxu0 0.0
    %902 = vmatprep.subr.mxu0 0.0
    %903 = vmatpush1.msra.mxu0 0.0
    %904 = vmatprep.subr.mxu0 0.0
    %905 = vmatpush1.msra.mxu0 0.0
    %906 = vmatprep.subr.mxu0 0.0
    %907 = vmatpush1.msra.mxu0 0.0
    %908 = vmatprep.subr.mxu0 0.0
    %909 = vmatpush1.msra.mxu0 0.0
    %910 = vmatprep.subr.mxu0 0.0
    %911 = vmatpush1.msra.mxu0 0.0
    %912 = vmatprep.subr.mxu0 0.0
    %913 = vmatpush1.msra.mxu0 0.0
    %914 = vmatprep.subr.mxu0 0.0
    %915 = vmatpush1.msra.mxu0 0.0
    %916 = vmatprep.subr.mxu0 0.0
    %917 = vmatpush1.msra.mxu0 0.0
    %918 = vmatprep.subr.mxu0 0.0
    %919 = vmatpush1.msra.mxu0 0.0
    %920 = vmatprep.subr.mxu0 0.0
    %921 = vmatpush1.msra.mxu0 0.0
    %922 = vmatprep.subr.mxu0 0.0
    %923 = vmatpush1.msra.mxu0 0.0
    %924 = vmatprep.subr.mxu0 0.0
    %925 = vmatpush1.msra.mxu0 0.0
    %926 = vmatprep.subr.mxu0 0.0
    %927 = vmatpush1.msra.mxu0 0.0
    %928 = vmatprep.subr.mxu0 0.0
    %929 = vmatpush1.msra.mxu0 0.0
    %930 = vmatprep.mubr.f32.mxu0 0.0
    %931 = vmatmul.mubr.f32.gmra.mrb[0].mxu0 %v864
    %v932 = vpop.f32.mrb[0].mxu0
    %v933 = vadd.f32 0.0, %v932
    %v934 = vpop.f32.mrb[0].mxu0
    %935 = vdwg.mxu0
    %v937 = vrot.slane %v933, 4
    %v939 = vadd.f32 %v145, %v937
    %v940 = vxor.u32 %v939, 2147483648
    %v941 = vmul.f32 %v940, 1.442695
    %v942 = vpow.pop %v941
    %v943 = vadd.f32 %v942, 1.0
    %v944 = vrcp.pop %v943
    %v945 = vmul.f32 1.0, %v944
    %v946 = vtanh.pop %v939
    %v948 = vrot.slane %v841, 6
    %v950 = vmul.f32 %v945, %v948
    %952 = vrot.lane.b32.xlu0 %v946, 32
    %v953 = vpop.permute.xlu0 %952
    %v955 = vmul.f32 %v945, %v953
    %957 = vrot.lane.b32.xlu0 %v955, 32
    %v958 = vpop.permute.xlu0 %957
    %v960 = vadd.f32 %v950, %v958
    %v961 = vtanh.pop %v960
    %963 = vrot.lane.b32.xlu0 %v961, 32
    %v964 = vpop.permute.xlu0 %963
    %v966 = vmul.f32 %v945, %v964
    %v968 = vcombine.high %v966, %v966
    %v970 = vunpack.c.l.s4 1983009808
    %v971 = vunpack.c.0.s8 %v970
    %v972 = vlaneseq
    %v973 = vshrl.u32 %v972, 7
    %v974 = vsub.s32 %v971, %v973
    %v975 = vrot.slane %v968, %v974
    %977 = vst.msk [vmem:[#allocation7 + $0x2] sm:$0x3] %vm505, %v975
    %v978 = vrot.slane %v966, 4
    %979 = vrot.lane.b32.xlu0 %v978, 64
    %v980 = vpop.permute.xlu0 %979
    %v981 = vsel %vm154, %v980, 0
    %983 = vmatprep.subr.mxu0 0.0
    %984 = vmatpush1.msra.mxu0 %v148
    %985 = vmatprep.subr.mxu0 0.0
    %986 = vmatpush1.msra.mxu0 %v149
    %987 = vmatprep.subr.mxu0 0.0
    %988 = vmatpush1.msra.mxu0 %v150
    %989 = vmatprep.subr.mxu0 0.0
    %990 = vmatpush1.msra.mxu0 %v151
    %991 = vmatprep.subr.mxu0 0.0
    %992 = vmatpush1.msra.mxu0 0.0
    %993 = vmatprep.subr.mxu0 0.0
    %994 = vmatpush1.msra.mxu0 0.0
    %995 = vmatprep.subr.mxu0 0.0
    %996 = vmatpush1.msra.mxu0 0.0
    %997 = vmatprep.subr.mxu0 0.0
    %998 = vmatpush1.msra.mxu0 0.0
    %999 = vmatprep.subr.mxu0 0.0
    %1000 = vmatpush1.msra.mxu0 0.0
    %1001 = vmatprep.subr.mxu0 0.0
    %1002 = vmatpush1.msra.mxu0 0.0
    %1003 = vmatprep.subr.mxu0 0.0
    %1004 = vmatpush1.msra.mxu0 0.0
    %1005 = vmatprep.subr.mxu0 0.0
    %1006 = vmatpush1.msra.mxu0 0.0
    %1007 = vmatprep.subr.mxu0 0.0
    %1008 = vmatpush1.msra.mxu0 0.0
    %1009 = vmatprep.subr.mxu0 0.0
    %1010 = vmatpush1.msra.mxu0 0.0
    %1011 = vmatprep.subr.mxu0 0.0
    %1012 = vmatpush1.msra.mxu0 0.0
    %1013 = vmatprep.subr.mxu0 0.0
    %1014 = vmatpush1.msra.mxu0 0.0
    %1015 = vmatprep.subr.mxu0 0.0
    %1016 = vmatpush1.msra.mxu0 0.0
    %1017 = vmatprep.subr.mxu0 0.0
    %1018 = vmatpush1.msra.mxu0 0.0
    %1019 = vmatprep.subr.mxu0 0.0
    %1020 = vmatpush1.msra.mxu0 0.0
    %1021 = vmatprep.subr.mxu0 0.0
    %1022 = vmatpush1.msra.mxu0 0.0
    %1023 = vmatprep.subr.mxu0 0.0
    %1024 = vmatpush1.msra.mxu0 0.0
    %1025 = vmatprep.subr.mxu0 0.0
    %1026 = vmatpush1.msra.mxu0 0.0
    %1027 = vmatprep.subr.mxu0 0.0
    %1028 = vmatpush1.msra.mxu0 0.0
    %1029 = vmatprep.subr.mxu0 0.0
    %1030 = vmatpush1.msra.mxu0 0.0
    %1031 = vmatprep.subr.mxu0 0.0
    %1032 = vmatpush1.msra.mxu0 0.0
    %1033 = vmatprep.subr.mxu0 0.0
    %1034 = vmatpush1.msra.mxu0 0.0
    %1035 = vmatprep.subr.mxu0 0.0
    %1036 = vmatpush1.msra.mxu0 0.0
    %1037 = vmatprep.subr.mxu0 0.0
    %1038 = vmatpush1.msra.mxu0 0.0
    %1039 = vmatprep.subr.mxu0 0.0
    %1040 = vmatpush1.msra.mxu0 0.0
    %1041 = vmatprep.subr.mxu0 0.0
    %1042 = vmatpush1.msra.mxu0 0.0
    %1043 = vmatprep.subr.mxu0 0.0
    %1044 = vmatpush1.msra.mxu0 0.0
    %1045 = vmatprep.subr.mxu0 0.0
    %1046 = vmatpush1.msra.mxu0 0.0
    %1047 = vmatprep.mubr.f32.mxu0 0.0
    %1048 = vmatmul.mubr.f32.gmra.mrb[0].mxu0 %v981
    %v1049 = vpop.f32.mrb[0].mxu0
    %v1050 = vadd.f32 0.0, %v1049
    %v1051 = vpop.f32.mrb[0].mxu0
    %1052 = vdwg.mxu0
    %v1054 = vrot.slane %v1050, 2
    %v1056 = vadd.f32 %v145, %v1054
    %v1057 = vxor.u32 %v1056, 2147483648
    %v1058 = vmul.f32 %v1057, 1.442695
    %v1059 = vpow.pop %v1058
    %v1060 = vadd.f32 %v1059, 1.0
    %v1061 = vrcp.pop %v1060
    %v1062 = vmul.f32 1.0, %v1061
    %v1063 = vtanh.pop %v1056
    %v1065 = vrot.slane %v960, 6
    %v1067 = vmul.f32 %v1062, %v1065
    %1069 = vrot.lane.b32.xlu0 %v1063, 32
    %v1070 = vpop.permute.xlu0 %1069
    %v1072 = vmul.f32 %v1062, %v1070
    %1074 = vrot.lane.b32.xlu0 %v1072, 32
    %v1075 = vpop.permute.xlu0 %1074
    %v1077 = vadd.f32 %v1067, %v1075
    %v1078 = vtanh.pop %v1077
    %1080 = vrot.lane.b32.xlu0 %v1078, 32
    %v1081 = vpop.permute.xlu0 %1080
    %v1083 = vmul.f32 %v1062, %v1081
    %v1085 = vcombine.high %v1083, %v1083
    %v1087 = vunpack.c.l.s4 1983009808
    %v1088 = vunpack.c.0.s8 %v1087
    %v1089 = vlaneseq
    %v1090 = vshrl.u32 %v1089, 7
    %v1091 = vsub.s32 %v1088, %v1090
    %v1092 = vrot.slane %v1085, %v1091
    %v1093 = vcombine.high %v1092, %v1092
    %1094 = vrot.lane.b32.xlu0 %v1093, 32
    %v1095 = vpop.permute.xlu0 %1094
    %1097 = vst.msk [vmem:[#allocation7 + $0x2] sm:$0x3] %vm626, %v1095
    %1098 = vrot.lane.b32.xlu0 %v1083, 64
    %v1099 = vpop.permute.xlu0 %1098
    %vm1101 = vcmask 261126
    %1102 = vst.msk [vmem:[#allocation8 - $0x6] sm:$0xc0] %vm1101, %v1099
    %1104 = vrot.lane.b32.xlu0 %v1077, 96
    %v1105 = vpop.permute.xlu0 %1104
    %1107 = vst.msk [vmem:[#allocation10 - $0x6] sm:$0xc0] %vm1101, %v1105
    // Predicated region
    $region34: #{tpu_custom_call.1} parent=1 // pred_check
      _
    $region35: #{tpu_custom_call.1} parent=1 // pred_check_branch
      %1109 = sbr.rel (0) target = $region37
    $region36: #{tpu_custom_call.1} parent=1 // pred_region
      %s1111 = ssub.s32 64, 64
      %1112 = vsyncadd [#allocation4], %s1111
      %s1114 = sshll.u32 [#allocation7], 4
      %s1115 = int_to_ptr.vmem [resolvable:$true] %s1114
      %1117 = dma.vmem_to_hbm [thread:$0]  %s1115, 64, %s6, [#allocation4]
    $region37: #{tpu_custom_call.1} parent=1 // pred_fallthru
      _
    // Predicated region
    $region38: #{tpu_custom_call.1} parent=1 // pred_check
      _
    $region39: #{tpu_custom_call.1} parent=1 // pred_check_branch
      %1119 = sbr.rel (0) target = $region41
    $region40: #{tpu_custom_call.1} parent=1 // pred_region
      %s1121 = ssub.s32 32, 32
      %1122 = vsyncadd [#allocation9], %s1121
      %s1124 = sshll.u32 [#allocation8], 4
      %s1125 = int_to_ptr.vmem [resolvable:$true] %s1124
      %1127 = dma.vmem_to_hbm [thread:$0]  %s1125, 32, %s7, [#allocation9]
    $region41: #{tpu_custom_call.1} parent=1 // pred_fallthru
      _
    // Predicated region
    $region42: #{tpu_custom_call.1} parent=1 // pred_check
      _
    $region43: #{tpu_custom_call.1} parent=1 // pred_check_branch
      %1129 = sbr.rel (0) target = $region45
    $region44: #{tpu_custom_call.1} parent=1 // pred_region
      %s1131 = ssub.s32 32, 32
      %1132 = vsyncadd [#allocation9], %s1131
      %s1134 = sshll.u32 [#allocation10], 4
      %s1135 = int_to_ptr.vmem [resolvable:$true] %s1134
      %1137 = dma.vmem_to_hbm [thread:$0]  %s1135, 32, %s8, [#allocation9]
    $region45: #{tpu_custom_call.1} parent=1 // pred_fallthru
      _
    // Predicated region
    $region46: #{tpu_custom_call.1} parent=1 // pred_check
      _
    $region47: #{tpu_custom_call.1} parent=1 // pred_check_branch
      %1139 = sbr.rel (0) target = $region49
    $region48: #{tpu_custom_call.1} parent=1 // pred_region
      %1140 = dma.done [#allocation4], 64
    $region49: #{tpu_custom_call.1} parent=1 // pred_fallthru
      _
    // Predicated region
    $region50: #{tpu_custom_call.1} parent=1 // pred_check
      _
    $region51: #{tpu_custom_call.1} parent=1 // pred_check_branch
      %1142 = sbr.rel (0) target = $region53
    $region52: #{tpu_custom_call.1} parent=1 // pred_region
      %1143 = dma.done [#allocation9], 32
    $region53: #{tpu_custom_call.1} parent=1 // pred_fallthru
      _
    // Predicated region
    $region54: #{tpu_custom_call.1} parent=1 // pred_check
      _
    $region55: #{tpu_custom_call.1} parent=1 // pred_check_branch
      %1145 = sbr.rel (0) target = $region57
    $region56: #{tpu_custom_call.1} parent=1 // pred_region
      %1146 = dma.done [#allocation9], 32
    $region57: #{tpu_custom_call.1} parent=1 // pred_fallthru
      _
    %1147 = vsyncpa [#allocation3], 1
    %1148 = vsyncpa [#allocation6], 1
    %1149 = vsyncpa [#allocation4], 1
    %1150 = vsyncpa [#allocation9], 1

</llo_original>
